<compile_context>
chip_gen: v6e
topology: v6e:2x2x1
jax: 0.10.0
libtpu: 0.0.40
codegen_flags: <defaults>
</compile_context>

<pallas_src>
import functools

import jax
import jax.numpy as jnp
import numpy as np
from jax.experimental import pallas as pl
from jax.experimental.pallas import tpu as pltpu


def dattention_kernel(x_ref, w1_ref, b1_ref, w2_ref, b2_ref, out_ref, *, B, D, A):
    """x_ref: [B*D + B, CHW] bf16 (key rows then query rows).
    w1_ref: [CHW, 2A] bf16 (= [W1k | W1q]); b1_ref: [1, 2A] f32.
    w2_ref: [2A, 2A] f32 (= blockdiag(W2k, W2q)); b2_ref: [1, 2A] f32.
    out_ref: [B, CHW] f32 (attention-pooled key)."""
    BD = B * D
    x = x_ref[...]                                            # [BD + B, CHW] bf16

    # Fused first Linear for keys AND queries: one bf16 MXU pass, f32 accum.
    h = jnp.dot(x, w1_ref[...], preferred_element_type=jnp.float32) + b1_ref[...]
    h = jnp.maximum(h, 0.0)                                   # [BD + B, 2A] f32

    # Fused (block-diagonal) second Linear — tiny f32 matmul.
    p = jnp.dot(h, w2_ref[...], preferred_element_type=jnp.float32) + b2_ref[...]

    kp = p[:BD, :A]                                           # key projections   [BD, A]
    qp = p[BD:, A:]                                           # query projections [B, A]

    # Tiny static unroll over batch for softmax + weighted pooling (VPU/XLU/EUP
    # work only — the MXU-heavy part above is already fully batched).
    for b in range(B):
        kp_b = kp[b * D:(b + 1) * D, :]                       # [D, A]
        qp_b = qp[b:b + 1, :]                                 # [1, A]

        # scores over frames: VPU multiply + lane reduce (no transpose, no MXU)
        s = jnp.sum(kp_b * qp_b, axis=-1, keepdims=True)      # [D, 1]

        # softmax over D (dim=1 in the PyTorch module)
        m = jnp.max(s, axis=0, keepdims=True)                 # [1, 1]
        e = jnp.exp(s - m)                                    # [D, 1]
        denom = jnp.sum(e, axis=0, keepdims=True)             # [1, 1]
        attn = e * pl.reciprocal(denom, approx=True)          # [D, 1]

        # frame-weighted sum: broadcast-multiply + sublane reduce, f32 accum
        key_b = x[b * D:(b + 1) * D, :].astype(jnp.float32)   # [D, CHW]
        out_ref[pl.ds(b, 1), :] = jnp.sum(key_b * attn, axis=0, keepdims=True)


def dattention(key, query, params):
    """key: [B, C, D, H, W] f32, query: [B, C, H, W] f32 -> [B, C, H, W] f32."""
    B, C, D, H, W = key.shape
    CHW = C * H * W
    A = params["w1k"].shape[1]
    R = B * D + B

    # Stack key rows (frame-major) and query rows into one [B*D + B, CHW]
    # operand, in bf16.  XLA fuses transpose + reshape + concat + convert into
    # a single HBM pass (the f32 -> bf16 cast has to touch key once anyway).
    key_flat = jnp.transpose(key, (0, 2, 1, 3, 4)).reshape(B * D, CHW)
    query_flat = query.reshape(B, CHW)
    x = jnp.concatenate([key_flat, query_flat], axis=0).astype(jnp.bfloat16)
    # TODO(synk): with a producer that already emits key as [B, D, CHW] (or
    # bf16), skip this relayout and feed the kernel directly.

    # Fuse the two MLPs' weights (done once per model in practice).
    w1 = jnp.concatenate([params["w1k"], params["w1q"]], axis=1).astype(jnp.bfloat16)
    b1 = jnp.concatenate([params["b1k"], params["b1q"]], axis=1)
    zA = jnp.zeros((A, A), jnp.float32)
    w2 = jnp.concatenate(
        [jnp.concatenate([params["w2k"], zA], axis=1),
         jnp.concatenate([zA, params["w2q"]], axis=1)], axis=0)   # [2A, 2A]
    b2 = jnp.concatenate([params["b2k"], params["b2q"]], axis=1)

    kernel = functools.partial(dattention_kernel, B=B, D=D, A=A)
    out_flat = pl.pallas_call(
        kernel,
        out_shape=jax.ShapeDtypeStruct((B, CHW), jnp.float32),
        grid=(1,),
        in_specs=[
            pl.BlockSpec((R, CHW), lambda i: (0, 0)),          # stacked key+query rows
            pl.BlockSpec((CHW, 2 * A), lambda i: (0, 0)),      # fused W1
            pl.BlockSpec((1, 2 * A), lambda i: (0, 0)),        # fused b1
            pl.BlockSpec((2 * A, 2 * A), lambda i: (0, 0)),    # block-diag W2
            pl.BlockSpec((1, 2 * A), lambda i: (0, 0)),        # fused b2
        ],
        out_specs=pl.BlockSpec((B, CHW), lambda i: (0, 0)),
        compiler_params=pltpu.CompilerParams(dimension_semantics=("arbitrary",)),
    )(x, w1, b1, w2, b2)

    return out_flat.reshape(B, C, H, W)


def init_params(rng, k_dim, q_dim, att_dim):
    """Deterministic synthetic init mirroring the module's _init_weights:
    kaiming_normal(mode='fan_out', nonlinearity='relu') for weights,
    PyTorch-Linear-style uniform for biases."""
    ks = jax.random.split(rng, 8)

    def kaiming(r, out_f, in_f):
        std = (2.0 / out_f) ** 0.5            # gain(relu)/sqrt(fan_out)
        w = std * jax.random.normal(r, (out_f, in_f), jnp.float32)
        return jnp.transpose(w)               # store as [in, out] for x @ W

    def bias(r, in_f, out_f):
        bound = 1.0 / (in_f ** 0.5)
        return jax.random.uniform(r, (1, out_f), jnp.float32, -bound, bound)

    return {
        "w1k": kaiming(ks[0], att_dim, k_dim), "b1k": bias(ks[1], k_dim, att_dim),
        "w2k": kaiming(ks[2], att_dim, att_dim), "b2k": bias(ks[3], att_dim, att_dim),
        "w1q": kaiming(ks[4], att_dim, q_dim), "b1q": bias(ks[5], q_dim, att_dim),
        "w2q": kaiming(ks[6], att_dim, att_dim), "b2q": bias(ks[7], att_dim, att_dim),
    }


def dattention_ref(key, query, params):
    """Pure-JAX reference of the PyTorch forward.  The large matmul operands
    (key/query rows and the first-layer weights) are quantized to bf16 to
    mirror the kernel's MXU precision; all accumulation, the second layer,
    softmax and the weighted sum are f32, as in the kernel."""
    B, C, D, H, W = key.shape
    CHW = C * H * W
    keyf = jnp.transpose(key, (0, 2, 1, 3, 4)).reshape(B, D, CHW)
    qf = query.reshape(B, 1, CHW)
    keyf_q = keyf.astype(jnp.bfloat16).astype(jnp.float32)
    qf_q = qf.astype(jnp.bfloat16).astype(jnp.float32)
    w1k = params["w1k"].astype(jnp.bfloat16).astype(jnp.float32)
    w1q = params["w1q"].astype(jnp.bfloat16).astype(jnp.float32)

    hk = jnp.maximum(jnp.einsum("bdf,fa->bda", keyf_q, w1k) + params["b1k"], 0.0)
    hq = jnp.maximum(jnp.einsum("bxf,fa->bxa", qf_q, w1q) + params["b1q"], 0.0)
    kp = hk @ params["w2k"] + params["b2k"]
    qp = hq @ params["w2q"] + params["b2q"]
    scores = jnp.einsum("bda,bxa->bd", kp, qp)          # x == 1
    attn = jax.nn.softmax(scores, axis=1)
    out = jnp.einsum("bd,bdf->bf", attn, keyf_q)        # kernel pools the bf16 key
    return out.reshape(B, C, H, W)


if __name__ == "__main__":
    B, C, D, H, W = 2, 4, 8, 8, 8          # D = nframe
    att_dim = 32
    k_dim = q_dim = C * H * W              # = 256

    rng = jax.random.PRNGKey(0)
    r_key, r_query, r_params = jax.random.split(rng, 3)
    key_t = jax.random.normal(r_key, (B, C, D, H, W), jnp.float32)
    query_t = jax.random.normal(r_query, (B, C, H, W), jnp.float32)
    params = init_params(r_params, k_dim, q_dim, att_dim)

    out = dattention(key_t, query_t, params)
    out = jax.block_until_ready(out)

    ref = dattention_ref(key_t, query_t, params)
    np.testing.assert_allclose(np.asarray(out), np.asarray(ref), rtol=1e-2, atol=1e-2)
    print("KERNEL_OK")
</pallas_src>

<mosaic_0001>
module attributes {stable_mosaic.version = 11 : i64} {
  func.func @dattention_kernel(%arg0: i32, %arg1: memref<18x256xbf16, #tpu.memory_space<vmem>>, %arg2: memref<256x64xbf16, #tpu.memory_space<vmem>>, %arg3: memref<1x64xf32, #tpu.memory_space<vmem>>, %arg4: memref<64x64xf32, #tpu.memory_space<vmem>>, %arg5: memref<1x64xf32, #tpu.memory_space<vmem>>, %arg6: memref<2x256xf32, #tpu.memory_space<vmem>>) attributes {dimension_semantics = [#tpu.dimension_semantics<arbitrary>], iteration_bounds = array<i64: 1>, scalar_prefetch = 0 : i64, scratch_operands = 0 : i64, tpu.core_type = #tpu.core_type<tc>, window_params = [{pipeline_mode = #tpu.pipeline_mode<synchronous>, transform_indices = @transform_0, window_bounds = array<i64: 18, 256>}, {pipeline_mode = #tpu.pipeline_mode<synchronous>, transform_indices = @transform_1, window_bounds = array<i64: 256, 64>}, {pipeline_mode = #tpu.pipeline_mode<synchronous>, transform_indices = @transform_2, window_bounds = array<i64: 1, 64>}, {pipeline_mode = #tpu.pipeline_mode<synchronous>, transform_indices = @transform_3, window_bounds = array<i64: 64, 64>}, {pipeline_mode = #tpu.pipeline_mode<synchronous>, transform_indices = @transform_4, window_bounds = array<i64: 1, 64>}, {pipeline_mode = #tpu.pipeline_mode<synchronous>, transform_indices = @transform_5, window_bounds = array<i64: 2, 256>}]} {
    %c0 = arith.constant 0 : index
    %c0_0 = arith.constant 0 : index
    %0 = vector.load %arg1[%c0, %c0_0] : memref<18x256xbf16, #tpu.memory_space<vmem>>, vector<18x256xbf16>
    %c0_1 = arith.constant 0 : index
    %c0_2 = arith.constant 0 : index
    %1 = vector.load %arg2[%c0_1, %c0_2] : memref<256x64xbf16, #tpu.memory_space<vmem>>, vector<256x64xbf16>
    %cst = arith.constant dense<0.000000e+00> : vector<18x64xf32>
    %2 = tpu.matmul %0, %1, %cst {dimension_numbers = #tpu.dot_dimension_numbers<[1], [0], [0], [1], [0, 0, 1, 1], [], []>} : vector<18x256xbf16>, vector<256x64xbf16>, vector<18x64xf32> -> vector<18x64xf32>
    %c0_3 = arith.constant 0 : index
    %c0_4 = arith.constant 0 : index
    %3 = vector.load %arg3[%c0_3, %c0_4] : memref<1x64xf32, #tpu.memory_space<vmem>>, vector<1x64xf32>
    %4 = vector.broadcast %3 : vector<1x64xf32> to vector<18x64xf32>
    %5 = arith.addf %2, %4 : vector<18x64xf32>
    %cst_5 = arith.constant 0.000000e+00 : f32
    %6 = vector.broadcast %cst_5 : f32 to vector<18x64xf32>
    %7 = arith.maximumf %5, %6 : vector<18x64xf32>
    %c0_6 = arith.constant 0 : index
    %c0_7 = arith.constant 0 : index
    %8 = vector.load %arg4[%c0_6, %c0_7] : memref<64x64xf32, #tpu.memory_space<vmem>>, vector<64x64xf32>
    %cst_8 = arith.constant dense<0.000000e+00> : vector<18x64xf32>
    %9 = tpu.matmul %7, %8, %cst_8 {dimension_numbers = #tpu.dot_dimension_numbers<[1], [0], [0], [1], [0, 0, 1, 1], [], []>} : vector<18x64xf32>, vector<64x64xf32>, vector<18x64xf32> -> vector<18x64xf32>
    %c0_9 = arith.constant 0 : index
    %c0_10 = arith.constant 0 : index
    %10 = vector.load %arg5[%c0_9, %c0_10] : memref<1x64xf32, #tpu.memory_space<vmem>>, vector<1x64xf32>
    %11 = vector.broadcast %10 : vector<1x64xf32> to vector<18x64xf32>
    %12 = arith.addf %9, %11 : vector<18x64xf32>
    %13 = vector.extract_strided_slice %12 {offsets = [0, 0], sizes = [16, 32], strides = [1, 1]} : vector<18x64xf32> to vector<16x32xf32>
    %14 = vector.extract_strided_slice %12 {offsets = [16, 32], sizes = [2, 32], strides = [1, 1]} : vector<18x64xf32> to vector<2x32xf32>
    %15 = vector.extract_strided_slice %13 {offsets = [0, 0], sizes = [8, 32], strides = [1, 1]} : vector<16x32xf32> to vector<8x32xf32>
    %16 = vector.extract_strided_slice %14 {offsets = [0, 0], sizes = [1, 32], strides = [1, 1]} : vector<2x32xf32> to vector<1x32xf32>
    %17 = vector.broadcast %16 : vector<1x32xf32> to vector<8x32xf32>
    %18 = arith.mulf %15, %17 : vector<8x32xf32>
    %cst_11 = arith.constant dense<0.000000e+00> : vector<8xf32>
    %19 = vector.multi_reduction <add>, %18, %cst_11 [1] : vector<8x32xf32> to vector<8xf32>
    %20 = vector.shape_cast %19 : vector<8xf32> to vector<8x1xf32>
    %cst_12 = arith.constant dense<0xFF800000> : vector<1xf32>
    %21 = vector.multi_reduction <maximumf>, %20, %cst_12 [0] : vector<8x1xf32> to vector<1xf32>
    %22 = vector.shape_cast %21 : vector<1xf32> to vector<1x1xf32>
    %23 = vector.broadcast %22 : vector<1x1xf32> to vector<8x1xf32>
    %24 = arith.subf %20, %23 : vector<8x1xf32>
    %25 = math.exp %24 : vector<8x1xf32>
    %cst_13 = arith.constant dense<0.000000e+00> : vector<1xf32>
    %26 = vector.multi_reduction <add>, %25, %cst_13 [0] : vector<8x1xf32> to vector<1xf32>
    %27 = vector.shape_cast %26 : vector<1xf32> to vector<1x1xf32>
    %28 = tpu.reciprocal %27 {approx = true} : vector<1x1xf32> -> vector<1x1xf32>
    %29 = vector.broadcast %28 : vector<1x1xf32> to vector<8x1xf32>
    %30 = arith.mulf %25, %29 : vector<8x1xf32>
    %31 = vector.extract_strided_slice %0 {offsets = [0, 0], sizes = [8, 256], strides = [1, 1]} : vector<18x256xbf16> to vector<8x256xbf16>
    %32 = arith.extf %31 : vector<8x256xbf16> to vector<8x256xf32>
    %33 = vector.broadcast %30 : vector<8x1xf32> to vector<8x256xf32>
    %34 = arith.mulf %32, %33 : vector<8x256xf32>
    %cst_14 = arith.constant dense<0.000000e+00> : vector<256xf32>
    %35 = vector.multi_reduction <add>, %34, %cst_14 [0] : vector<8x256xf32> to vector<256xf32>
    %36 = vector.shape_cast %35 : vector<256xf32> to vector<1x256xf32>
    %c0_15 = arith.constant 0 : index
    %c0_16 = arith.constant 0 : index
    %37 = vector.load %arg6[%c0_15, %c0_16] : memref<2x256xf32, #tpu.memory_space<vmem>>, vector<1x256xf32>
    tpu.vector_store %arg6[%c0_15, %c0_16], %36 {strides = array<i32>} : memref<2x256xf32, #tpu.memory_space<vmem>>, vector<1x256xf32>,
    %38 = vector.extract_strided_slice %13 {offsets = [8, 0], sizes = [8, 32], strides = [1, 1]} : vector<16x32xf32> to vector<8x32xf32>
    %39 = vector.extract_strided_slice %14 {offsets = [1, 0], sizes = [1, 32], strides = [1, 1]} : vector<2x32xf32> to vector<1x32xf32>
    %40 = vector.broadcast %39 : vector<1x32xf32> to vector<8x32xf32>
    %41 = arith.mulf %38, %40 : vector<8x32xf32>
    %cst_17 = arith.constant dense<0.000000e+00> : vector<8xf32>
    %42 = vector.multi_reduction <add>, %41, %cst_17 [1] : vector<8x32xf32> to vector<8xf32>
    %43 = vector.shape_cast %42 : vector<8xf32> to vector<8x1xf32>
    %cst_18 = arith.constant dense<0xFF800000> : vector<1xf32>
    %44 = vector.multi_reduction <maximumf>, %43, %cst_18 [0] : vector<8x1xf32> to vector<1xf32>
    %45 = vector.shape_cast %44 : vector<1xf32> to vector<1x1xf32>
    %46 = vector.broadcast %45 : vector<1x1xf32> to vector<8x1xf32>
    %47 = arith.subf %43, %46 : vector<8x1xf32>
    %48 = math.exp %47 : vector<8x1xf32>
    %cst_19 = arith.constant dense<0.000000e+00> : vector<1xf32>
    %49 = vector.multi_reduction <add>, %48, %cst_19 [0] : vector<8x1xf32> to vector<1xf32>
    %50 = vector.shape_cast %49 : vector<1xf32> to vector<1x1xf32>
    %51 = tpu.reciprocal %50 {approx = true} : vector<1x1xf32> -> vector<1x1xf32>
    %52 = vector.broadcast %51 : vector<1x1xf32> to vector<8x1xf32>
    %53 = arith.mulf %48, %52 : vector<8x1xf32>
    %54 = vector.extract_strided_slice %0 {offsets = [8, 0], sizes = [8, 256], strides = [1, 1]} : vector<18x256xbf16> to vector<8x256xbf16>
    %55 = arith.extf %54 : vector<8x256xbf16> to vector<8x256xf32>
    %56 = vector.broadcast %53 : vector<8x1xf32> to vector<8x256xf32>
    %57 = arith.mulf %55, %56 : vector<8x256xf32>
    %cst_20 = arith.constant dense<0.000000e+00> : vector<256xf32>
    %58 = vector.multi_reduction <add>, %57, %cst_20 [0] : vector<8x256xf32> to vector<256xf32>
    %59 = vector.shape_cast %58 : vector<256xf32> to vector<1x256xf32>
    %c1 = arith.constant 1 : index
    %c0_21 = arith.constant 0 : index
    %60 = vector.load %arg6[%c1, %c0_21] : memref<2x256xf32, #tpu.memory_space<vmem>>, vector<1x256xf32>
    tpu.vector_store %arg6[%c1, %c0_21], %59 {strides = array<i32>} : memref<2x256xf32, #tpu.memory_space<vmem>>, vector<1x256xf32>,
    return
  }
  func.func @transform_0(%arg0: i32) -> (i32, i32) {
    %c0_i32 = arith.constant 0 : i32
    %c0_i32_0 = arith.constant 0 : i32
    %c0_i32_1 = arith.constant 0 : i32
    return %c0_i32, %c0_i32_0 : i32, i32
  }
  func.func @transform_1(%arg0: i32) -> (i32, i32) {
    %c0_i32 = arith.constant 0 : i32
    %c0_i32_0 = arith.constant 0 : i32
    %c0_i32_1 = arith.constant 0 : i32
    return %c0_i32, %c0_i32_0 : i32, i32
  }
  func.func @transform_2(%arg0: i32) -> (i32, i32) {
    %c0_i32 = arith.constant 0 : i32
    %c0_i32_0 = arith.constant 0 : i32
    %c0_i32_1 = arith.constant 0 : i32
    return %c0_i32, %c0_i32_0 : i32, i32
  }
  func.func @transform_3(%arg0: i32) -> (i32, i32) {
    %c0_i32 = arith.constant 0 : i32
    %c0_i32_0 = arith.constant 0 : i32
    %c0_i32_1 = arith.constant 0 : i32
    return %c0_i32, %c0_i32_0 : i32, i32
  }
  func.func @transform_4(%arg0: i32) -> (i32, i32) {
    %c0_i32 = arith.constant 0 : i32
    %c0_i32_0 = arith.constant 0 : i32
    %c0_i32_1 = arith.constant 0 : i32
    return %c0_i32, %c0_i32_0 : i32, i32
  }
  func.func @transform_5(%arg0: i32) -> (i32, i32) {
    %c0_i32 = arith.constant 0 : i32
    %c0_i32_0 = arith.constant 0 : i32
    %c0_i32_1 = arith.constant 0 : i32
    return %c0_i32, %c0_i32_0 : i32, i32
  }
}

</mosaic_0001>

<llo_original>
// kernel: tpu_custom_call.1
$region0: #{tpu_custom_call.1}
  #allocation0 [shape = 'u32[]', space=smem, size = 0x4, offset = 0x4, fixed_abs, tag = 'smem constant byte address 0x4 - core index']
  #allocation1 [shape = 'u32[144,128]{1,0:T(1,128)}', space=vmem, size = 0x12000, scoped, tag = 'internal scratch']
  %s0 = inlined_call_operand.vmem [shape: bf16[18,256], index: 0, kind: input, shape index: {}]
  %s1 = inlined_call_operand.vmem [shape: bf16[256,64], index: 1, kind: input, shape index: {}]
  %s2 = inlined_call_operand.vmem [shape: f32[1,64], index: 2, kind: input, shape index: {}]
  %s3 = inlined_call_operand.vmem [shape: f32[64,64], index: 3, kind: input, shape index: {}]
  %s4 = inlined_call_operand.vmem [shape: f32[1,64], index: 4, kind: input, shape index: {}]
  %s5 = inlined_call_operand.hbm [shape: f32[2,256], index: 5, kind: output, shape index: {}]
  %s6 = sld [smem:[#allocation0]]
  $region30: #{tpu_custom_call.1} parent=0
    _
  %s8 = ssub.s32 1, %s6
  %s9 = scalar_select 0, %s8, %s6
  $region1: #{tpu_custom_call.1} parent=0
    #allocation2 [shape = 'u8[2048]{0}', space=vmem, size = 0x800, scoped, tag = 'output window, operand 0, single buffered']
    #allocation3 [shape = 's32[1]{0}', space=sflag, size = 0x4, scoped, tag = 'scoped memory for tpu_custom_call.1']
    %10 = vsyncpa [#allocation3], 0
    // Predicated region
    $region2: #{tpu_custom_call.1} parent=1 // pred_check
      _
    $region3: #{tpu_custom_call.1} parent=1 // pred_check_branch
      %12 = sbr.rel (0) target = $region5
    $region4: #{tpu_custom_call.1} parent=1 // pred_region
      _
    $region5: #{tpu_custom_call.1} parent=1 // pred_fallthru
      _
    // Predicated region
    $region6: #{tpu_custom_call.1} parent=1 // pred_check
      _
    $region7: #{tpu_custom_call.1} parent=1 // pred_check_branch
      %14 = sbr.rel (0) target = $region9
    $region8: #{tpu_custom_call.1} parent=1 // pred_region
      _
    $region9: #{tpu_custom_call.1} parent=1 // pred_fallthru
      _
    // Predicated region
    $region10: #{tpu_custom_call.1} parent=1 // pred_check
      _
    $region11: #{tpu_custom_call.1} parent=1 // pred_check_branch
      %16 = sbr.rel (0) target = $region13
    $region12: #{tpu_custom_call.1} parent=1 // pred_region
      _
    $region13: #{tpu_custom_call.1} parent=1 // pred_fallthru
      _
    // Predicated region
    $region14: #{tpu_custom_call.1} parent=1 // pred_check
      _
    $region15: #{tpu_custom_call.1} parent=1 // pred_check_branch
      %18 = sbr.rel (0) target = $region17
    $region16: #{tpu_custom_call.1} parent=1 // pred_region
      _
    $region17: #{tpu_custom_call.1} parent=1 // pred_fallthru
      _
    // Predicated region
    $region18: #{tpu_custom_call.1} parent=1 // pred_check
      _
    $region19: #{tpu_custom_call.1} parent=1 // pred_check_branch
      %20 = sbr.rel (0) target = $region21
    $region20: #{tpu_custom_call.1} parent=1 // pred_region
      _
    $region21: #{tpu_custom_call.1} parent=1 // pred_fallthru
      _
    %v22 = vld [vmem:[%s0] sm:$0xff]
    %v23 = vld [vmem:[%s0 + $0x8] sm:$0xff]
    %v24 = vld [vmem:[%s0 + $0x10] sm:$0x11]
    %v25 = vld [vmem:[%s1] sm:$0xf]
    %v26 = vld [vmem:[%s1 + $0x4] sm:$0xf]
    %v27 = vld [vmem:[%s1 + $0x8] sm:$0xf]
    %v28 = vld [vmem:[%s1 + $0xc] sm:$0xf]
    %v29 = vld [vmem:[%s1 + $0x10] sm:$0xf]
    %v30 = vld [vmem:[%s1 + $0x14] sm:$0xf]
    %v31 = vld [vmem:[%s1 + $0x18] sm:$0xf]
    %v32 = vld [vmem:[%s1 + $0x1c] sm:$0xf]
    %v33 = vld [vmem:[%s1 + $0x20] sm:$0xf]
    %v34 = vld [vmem:[%s1 + $0x24] sm:$0xf]
    %v35 = vld [vmem:[%s1 + $0x28] sm:$0xf]
    %v36 = vld [vmem:[%s1 + $0x2c] sm:$0xf]
    %v37 = vld [vmem:[%s1 + $0x30] sm:$0xf]
    %v38 = vld [vmem:[%s1 + $0x34] sm:$0xf]
    %v39 = vld [vmem:[%s1 + $0x38] sm:$0xf]
    %v40 = vld [vmem:[%s1 + $0x3c] sm:$0xf]
    %v41 = vld [vmem:[%s1 + $0x40] sm:$0xf]
    %v42 = vld [vmem:[%s1 + $0x44] sm:$0xf]
    %v43 = vld [vmem:[%s1 + $0x48] sm:$0xf]
    %v44 = vld [vmem:[%s1 + $0x4c] sm:$0xf]
    %v45 = vld [vmem:[%s1 + $0x50] sm:$0xf]
    %v46 = vld [vmem:[%s1 + $0x54] sm:$0xf]
    %v47 = vld [vmem:[%s1 + $0x58] sm:$0xf]
    %v48 = vld [vmem:[%s1 + $0x5c] sm:$0xf]
    %v49 = vld [vmem:[%s1 + $0x60] sm:$0xf]
    %v50 = vld [vmem:[%s1 + $0x64] sm:$0xf]
    %v51 = vld [vmem:[%s1 + $0x68] sm:$0xf]
    %v52 = vld [vmem:[%s1 + $0x6c] sm:$0xf]
    %v53 = vld [vmem:[%s1 + $0x70] sm:$0xf]
    %v54 = vld [vmem:[%s1 + $0x74] sm:$0xf]
    %v55 = vld [vmem:[%s1 + $0x78] sm:$0xf]
    %v56 = vld [vmem:[%s1 + $0x7c] sm:$0xf]
    %v57 = vld [vmem:[%s2] sm:$0x1]
    %v59 = vlaneseq
    %v60 = vshrl.u32 %v59, 7
    %v61 = vsub.s32 0, %v60
    %v62 = vrot.slane %v57, %v61
    %v67 = vunpack.c.l.b16 %v22
    %v68 = vunpack.c.h.b16 %v22
    %v69 = vunpack.c.l.b16 %v23
    %v70 = vunpack.c.h.b16 %v23
    %v71 = vunpack.c.l.b16 %v24
    %v72 = vunpack.c.h.b16 %v24
    %v73 = vpack.c.b16 %v69, %v67
    %v74 = vpack.c.b16 %v70, %v68
    %v75 = vpack.c.b16 %v71, %v71
    %v76 = vpack.c.b16 %v72, %v72
    %v113 = vunpack.c.l.b16 %v25
    %v114 = vunpack.c.l.b16 %v26
    %v115 = vunpack.c.l.b16 %v27
    %v116 = vunpack.c.l.b16 %v28
    %v117 = vunpack.c.l.b16 %v29
    %v118 = vunpack.c.l.b16 %v30
    %v119 = vunpack.c.l.b16 %v31
    %v120 = vunpack.c.l.b16 %v32
    %v121 = vunpack.c.l.b16 %v33
    %v122 = vunpack.c.l.b16 %v34
    %v123 = vunpack.c.l.b16 %v35
    %v124 = vunpack.c.l.b16 %v36
    %v125 = vunpack.c.l.b16 %v37
    %v126 = vunpack.c.l.b16 %v38
    %v127 = vunpack.c.l.b16 %v39
    %v128 = vunpack.c.l.b16 %v40
    %v129 = vunpack.c.l.b16 %v41
    %v130 = vunpack.c.l.b16 %v42
    %v131 = vunpack.c.l.b16 %v43
    %v132 = vunpack.c.l.b16 %v44
    %v133 = vunpack.c.l.b16 %v45
    %v134 = vunpack.c.l.b16 %v46
    %v135 = vunpack.c.l.b16 %v47
    %v136 = vunpack.c.l.b16 %v48
    %v137 = vunpack.c.l.b16 %v49
    %v138 = vunpack.c.l.b16 %v50
    %v139 = vunpack.c.l.b16 %v51
    %v140 = vunpack.c.l.b16 %v52
    %v141 = vunpack.c.l.b16 %v53
    %v142 = vunpack.c.l.b16 %v54
    %v143 = vunpack.c.l.b16 %v55
    %v144 = vunpack.c.l.b16 %v56
    %v145 = vpack.c.b16 %v114, %v113
    %v146 = vpack.c.b16 %v116, %v115
    %v147 = vpack.c.b16 %v118, %v117
    %v148 = vpack.c.b16 %v120, %v119
    %v149 = vpack.c.b16 %v122, %v121
    %v150 = vpack.c.b16 %v124, %v123
    %v151 = vpack.c.b16 %v126, %v125
    %v152 = vpack.c.b16 %v128, %v127
    %v153 = vpack.c.b16 %v130, %v129
    %v154 = vpack.c.b16 %v132, %v131
    %v155 = vpack.c.b16 %v134, %v133
    %v156 = vpack.c.b16 %v136, %v135
    %v157 = vpack.c.b16 %v138, %v137
    %v158 = vpack.c.b16 %v140, %v139
    %v159 = vpack.c.b16 %v142, %v141
    %v160 = vpack.c.b16 %v144, %v143
    %177 = vmatprep.subr.bf16.mxu0 0
    %178 = vmatpush1.bf16.msra.mxu0 %v152
    %179 = vmatprep.subr.bf16.mxu0 0
    %180 = vmatpush1.bf16.msra.mxu0 %v151
    %181 = vmatprep.subr.bf16.mxu0 0
    %182 = vmatpush1.bf16.msra.mxu0 %v150
    %183 = vmatprep.subr.bf16.mxu0 0
    %184 = vmatpush1.bf16.msra.mxu0 %v149
    %185 = vmatprep.subr.bf16.mxu0 0
    %186 = vmatpush1.bf16.msra.mxu0 %v148
    %187 = vmatprep.subr.bf16.mxu0 0
    %188 = vmatpush1.bf16.msra.mxu0 %v147
    %189 = vmatprep.subr.bf16.mxu0 0
    %190 = vmatpush1.bf16.msra.mxu0 %v146
    %191 = vmatprep.subr.bf16.mxu0 0
    %192 = vmatpush1.bf16.msra.mxu0 %v145
    %193 = vmatprep.subr.bf16.mxu0 0
    %194 = vmatpush2.bf16.msra.mxu0 %v160
    %195 = vmatprep.subr.bf16.mxu0 0
    %196 = vmatpush2.bf16.msra.mxu0 %v159
    %197 = vmatprep.subr.bf16.mxu0 0
    %198 = vmatpush2.bf16.msra.mxu0 %v158
    %199 = vmatprep.subr.bf16.mxu0 0
    %200 = vmatpush2.bf16.msra.mxu0 %v157
    %201 = vmatprep.subr.bf16.mxu0 0
    %202 = vmatpush2.bf16.msra.mxu0 %v156
    %203 = vmatprep.subr.bf16.mxu0 0
    %204 = vmatpush2.bf16.msra.mxu0 %v155
    %205 = vmatprep.subr.bf16.mxu0 0
    %206 = vmatpush2.bf16.msra.mxu0 %v154
    %207 = vmatprep.subr.bf16.mxu0 0
    %208 = vmatpush2.bf16.msra.mxu0 %v153
    %209 = vmatprep.mubr.bf16.mxu0 %v74
    %210 = vmatmul.mubr.bf16.gmra.mxu0 %v73
    %v211 = vpop.f32.mrf.mxu0
    %v212 = vadd.f32 %v62, %v211
    %v213 = vpop.f32.mrf.mxu0
    %v214 = vpop.f32.mrf.mxu0
    %v215 = vadd.f32 %v62, %v214
    %v216 = vpop.f32.mrf.mxu0
    %217 = vmatprep.mubr.bf16.mxu0 %v76
    %218 = vmatmul.mubr.bf16.gmra.mxu0 %v75
    %v219 = vpop.f32.mrf.mxu0
    %v220 = vadd.f32 %v62, %v219
    %v221 = vpop.f32.mrf.mxu0
    %v222 = vpop.f32.mrf.mxu0
    %v223 = vpop.f32.mrf.mxu0
    %224 = vdwg.mxu0
    %v225 = vmax.f32 %v212, 0.0
    %v226 = vmax.f32 %v215, 0.0
    %v227 = vmax.f32 %v220, 0.0
    %v228 = vld [vmem:[%s3] sm:$0xff]
    %v229 = vld [vmem:[%s3 + $0x8] sm:$0xff]
    %v230 = vld [vmem:[%s3 + $0x10] sm:$0xff]
    %v231 = vld [vmem:[%s3 + $0x18] sm:$0xff]
    %v232 = vld [vmem:[%s3 + $0x20] sm:$0xff]
    %v233 = vld [vmem:[%s3 + $0x28] sm:$0xff]
    %v234 = vld [vmem:[%s3 + $0x30] sm:$0xff]
    %v235 = vld [vmem:[%s3 + $0x38] sm:$0xff]
    %v236 = vld [vmem:[%s4] sm:$0x1]
    %v238 = vlaneseq
    %v239 = vshrl.u32 %v238, 7
    %v240 = vsub.s32 0, %v239
    %v241 = vrot.slane %v236, %v240
    %vm243 = vcmask 523264
    %v245 = vsel %vm243, %v225, 0
    %v248 = vsel %vm243, %v226, 0
    %v251 = vsel %vm243, %v227, 0
    %253 = vmatprep.subr.mxu0 0.0
    %254 = vmatpush1.msra.mxu0 0.0
    %255 = vmatprep.subr.mxu0 0.0
    %256 = vmatpush1.msra.mxu0 0.0
    %257 = vmatprep.subr.mxu0 0.0
    %258 = vmatpush1.msra.mxu0 0.0
    %259 = vmatprep.subr.mxu0 0.0
    %260 = vmatpush1.msra.mxu0 0.0
    %261 = vmatprep.subr.mxu0 0.0
    %262 = vmatpush1.msra.mxu0 0.0
    %263 = vmatprep.subr.mxu0 0.0
    %264 = vmatpush1.msra.mxu0 0.0
    %265 = vmatprep.subr.mxu0 0.0
    %266 = vmatpush1.msra.mxu0 0.0
    %267 = vmatprep.subr.mxu0 0.0
    %268 = vmatpush1.msra.mxu0 0.0
    %269 = vmatprep.subr.mxu0 0.0
    %270 = vmatpush1.msra.mxu0 %v235
    %271 = vmatprep.subr.mxu0 0.0
    %272 = vmatpush1.msra.mxu0 %v234
    %273 = vmatprep.subr.mxu0 0.0
    %274 = vmatpush1.msra.mxu0 %v233
    %275 = vmatprep.subr.mxu0 0.0
    %276 = vmatpush1.msra.mxu0 %v232
    %277 = vmatprep.subr.mxu0 0.0
    %278 = vmatpush1.msra.mxu0 %v231
    %279 = vmatprep.subr.mxu0 0.0
    %280 = vmatpush1.msra.mxu0 %v230
    %281 = vmatprep.subr.mxu0 0.0
    %282 = vmatpush1.msra.mxu0 %v229
    %283 = vmatprep.subr.mxu0 0.0
    %284 = vmatpush1.msra.mxu0 %v228
    %285 = vmatprep.subr.mxu0 0.0
    %286 = vmatpush2.msra.mxu0 0.0
    %287 = vmatprep.subr.mxu0 0.0
    %288 = vmatpush2.msra.mxu0 0.0
    %289 = vmatprep.subr.mxu0 0.0
    %290 = vmatpush2.msra.mxu0 0.0
    %291 = vmatprep.subr.mxu0 0.0
    %292 = vmatpush2.msra.mxu0 0.0
    %293 = vmatprep.subr.mxu0 0.0
    %294 = vmatpush2.msra.mxu0 0.0
    %295 = vmatprep.subr.mxu0 0.0
    %296 = vmatpush2.msra.mxu0 0.0
    %297 = vmatprep.subr.mxu0 0.0
    %298 = vmatpush2.msra.mxu0 0.0
    %299 = vmatprep.subr.mxu0 0.0
    %300 = vmatpush2.msra.mxu0 0.0
    %301 = vmatprep.subr.mxu0 0.0
    %302 = vmatpush2.msra.mxu0 0.0
    %303 = vmatprep.subr.mxu0 0.0
    %304 = vmatpush2.msra.mxu0 0.0
    %305 = vmatprep.subr.mxu0 0.0
    %306 = vmatpush2.msra.mxu0 0.0
    %307 = vmatprep.subr.mxu0 0.0
    %308 = vmatpush2.msra.mxu0 0.0
    %309 = vmatprep.subr.mxu0 0.0
    %310 = vmatpush2.msra.mxu0 0.0
    %311 = vmatprep.subr.mxu0 0.0
    %312 = vmatpush2.msra.mxu0 0.0
    %313 = vmatprep.subr.mxu0 0.0
    %314 = vmatpush2.msra.mxu0 0.0
    %315 = vmatprep.subr.mxu0 0.0
    %316 = vmatpush2.msra.mxu0 0.0
    %317 = vmatprep.mubr.f32.mxu0 0.0
    %318 = vmatmul.mubr.f32.gmra.mxu0 %v245
    %v319 = vpop.f32.mrf.mxu0
    %v320 = vadd.f32 %v241, %v319
    %v321 = vpop.f32.mrf.mxu0
    %322 = vmatprep.mubr.f32.mxu0 0.0
    %323 = vmatmul.mubr.f32.gmra.mxu0 %v248
    %v324 = vpop.f32.mrf.mxu0
    %v325 = vadd.f32 %v241, %v324
    %v326 = vpop.f32.mrf.mxu0
    %327 = vmatprep.mubr.f32.mxu0 0.0
    %328 = vmatmul.mubr.f32.gmra.mxu0 %v251
    %v329 = vpop.f32.mrf.mxu0
    %v330 = vadd.f32 %v241, %v329
    %v331 = vpop.f32.mrf.mxu0
    %332 = vdwg.mxu0
    %v333 = vlaneseq
    %v334 = vshrl.u32 %v333, 7
    %v335 = vsub.s32 0, %v334
    %v336 = vrot.slane %v330, %v335
    %338 = vrot.lane.b32.xlu0 %v336, 96
    %v339 = vpop.permute.xlu0 %338
    %v341 = vmul.f32 %v320, %v339
    %vm342 = vcmask 261120
    %v343 = vsel %vm342, %v341, 0.0
    %344 = vadd.xlane.f32.xlu0 %v343
    %v345 = vpop.xlane.xlu0 %344
    %v346 = vrot.slane %v345, 4
    %v347 = vmax.f32 %v345, %v346
    %v348 = vrot.slane %v347, 2
    %v349 = vmax.f32 %v347, %v348
    %v350 = vrot.slane %v349, 1
    %v351 = vmax.f32 %v349, %v350
    %v352 = vsub.f32 %v345, %v351
    %v353 = vmul.f32 %v352, 1.442695
    %v354 = vpow.pop %v353
    %v355 = vrot.slane %v354, 4
    %v356 = vadd.f32 %v354, %v355
    %v357 = vrot.slane %v356, 2
    %v358 = vadd.f32 %v356, %v357
    %v359 = vrot.slane %v358, 1
    %v360 = vadd.f32 %v358, %v359
    %v361 = vrcp.pop %v360
    %v362 = vmul.f32 %v354, %v361
    %v363 = vunpack.c.l.bf16 %v22
    %v364 = vunpack.c.h.bf16 %v22
    %v365 = vmul.f32 %v363, %v362
    %v366 = vmul.f32 %v364, %v362
    %v367 = vrot.slane %v365, 4
    %v368 = vadd.f32 %v365, %v367
    %v369 = vrot.slane %v368, 2
    %v370 = vadd.f32 %v368, %v369
    %v371 = vrot.slane %v370, 1
    %v372 = vadd.f32 %v370, %v371
    %v373 = vrot.slane %v366, 4
    %v374 = vadd.f32 %v366, %v373
    %v375 = vrot.slane %v374, 2
    %v376 = vadd.f32 %v374, %v375
    %v377 = vrot.slane %v376, 1
    %v378 = vadd.f32 %v376, %v377
    %v381 = vcombine.low %v372, %v378
    %v383 = vunpack.c.l.s4 1966171168
    %v384 = vunpack.c.0.s8 %v383
    %v385 = vlaneseq
    %v386 = vshrl.u32 %v385, 7
    %v387 = vsub.s32 %v384, %v386
    %v388 = vrot.slane %v381, %v387
    %v390 = vunpack.c.l.s4 1966171168
    %v391 = vunpack.c.0.s8 %v390
    %v392 = vlaneseq
    %v393 = vshrl.u32 %v392, 7
    %v394 = vsub.s32 %v391, %v393
    %v395 = vrot.slane %v388, %v394
    %v397 = vlaneseq
    %vm398 = vcmp.ge.s32.totalorder %v397, 0
    %vm399 = vcmp.lt.s32.totalorder %v397, 256
    %vm400 = vmand %vm398, %vm399
    %401 = vst.msk [vmem:[#allocation2] ss:$2 sm:$0x3] %vm400, %v395
    %v402 = vlaneseq
    %v403 = vshrl.u32 %v402, 7
    %v404 = vsub.s32 1, %v403
    %v405 = vrot.slane %v330, %v404
    %407 = vrot.lane.b32.xlu0 %v405, 96
    %v408 = vpop.permute.xlu0 %407
    %v410 = vmul.f32 %v325, %v408
    %v411 = vsel %vm342, %v410, 0.0
    %412 = vadd.xlane.f32.xlu0 %v411
    %v413 = vpop.xlane.xlu0 %412
    %v414 = vrot.slane %v413, 4
    %v415 = vmax.f32 %v413, %v414
    %v416 = vrot.slane %v415, 2
    %v417 = vmax.f32 %v415, %v416
    %v418 = vrot.slane %v417, 1
    %v419 = vmax.f32 %v417, %v418
    %v420 = vsub.f32 %v413, %v419
    %v421 = vmul.f32 %v420, 1.442695
    %v422 = vpow.pop %v421
    %v423 = vrot.slane %v422, 4
    %v424 = vadd.f32 %v422, %v423
    %v425 = vrot.slane %v424, 2
    %v426 = vadd.f32 %v424, %v425
    %v427 = vrot.slane %v426, 1
    %v428 = vadd.f32 %v426, %v427
    %v429 = vrcp.pop %v428
    %v430 = vmul.f32 %v422, %v429
    %v431 = vunpack.c.l.bf16 %v23
    %v432 = vunpack.c.h.bf16 %v23
    %v433 = vmul.f32 %v431, %v430
    %v434 = vmul.f32 %v432, %v430
    %v435 = vrot.slane %v433, 4
    %v436 = vadd.f32 %v433, %v435
    %v437 = vrot.slane %v436, 2
    %v438 = vadd.f32 %v436, %v437
    %v439 = vrot.slane %v438, 1
    %v440 = vadd.f32 %v438, %v439
    %v441 = vrot.slane %v434, 4
    %v442 = vadd.f32 %v434, %v441
    %v443 = vrot.slane %v442, 2
    %v444 = vadd.f32 %v442, %v443
    %v445 = vrot.slane %v444, 1
    %v446 = vadd.f32 %v444, %v445
    %v449 = vcombine.low %v440, %v446
    %v451 = vunpack.c.l.s4 1966171168
    %v452 = vunpack.c.0.s8 %v451
    %v453 = vlaneseq
    %v454 = vshrl.u32 %v453, 7
    %v455 = vsub.s32 %v452, %v454
    %v456 = vrot.slane %v449, %v455
    %v458 = vunpack.c.l.s4 1966171168
    %v459 = vunpack.c.0.s8 %v458
    %v460 = vlaneseq
    %v461 = vshrl.u32 %v460, 7
    %v462 = vsub.s32 %v459, %v461
    %v463 = vrot.slane %v456, %v462
    %s465 = scalar_lea.vmem [#allocation2], 1
    %466 = vst.msk [vmem:[%s465] ss:$2 sm:$0x3] %vm400, %v463
    // Predicated region
    $region22: #{tpu_custom_call.1} parent=1 // pred_check
      _
    $region23: #{tpu_custom_call.1} parent=1 // pred_check_branch
      %468 = sbr.rel (0) target = $region25
    $region24: #{tpu_custom_call.1} parent=1 // pred_region
      %s470 = ssub.s32 64, 64
      %471 = vsyncadd [#allocation3], %s470
      %s473 = sshll.u32 [#allocation2], 4
      %s474 = int_to_ptr.vmem [resolvable:$true] %s473
      %476 = dma.vmem_to_hbm [thread:$0]  %s474, 64, %s5, [#allocation3]
    $region25: #{tpu_custom_call.1} parent=1 // pred_fallthru
      _
    // Predicated region
    $region26: #{tpu_custom_call.1} parent=1 // pred_check
      _
    $region27: #{tpu_custom_call.1} parent=1 // pred_check_branch
      %478 = sbr.rel (0) target = $region29
    $region28: #{tpu_custom_call.1} parent=1 // pred_region
      %479 = dma.done [#allocation3], 64
    $region29: #{tpu_custom_call.1} parent=1 // pred_fallthru
      _
    %480 = vsyncpa [#allocation3], 1

</llo_original>
